<compile_context>
chip_gen: v5e
topology: v5e:2x2
jax: 0.10.0
libtpu: 0.0.40
codegen_flags: <defaults>
</compile_context>

<pallas_src>
import jax
import jax.numpy as jnp
from jax.experimental import pallas as pl
from jax.experimental.pallas import tpu as pltpu

STATES_DIM = 3
ACTION_DIM = 2          # forward hard-codes the 2x2 structure (th[:, :2] / th[:, 2:])
HIDDEN1 = 128
HIDDEN2 = 64
INIT_W = 0.003
OUT3 = 8                # fused layer-3 rows: 2 (nz) + 4 (th) + 2 zero-pad


# ----------------------------------------------------------------------------
# Kernel: everything transposed, batch on the lane (last) axis.
# ----------------------------------------------------------------------------
def actor_kernel(x_ref,                       # (4, TB)  f32: [state^T ; ones]
                 w1_ref,                      # (256, 4) bf16 (layer-1 bias folded)
                 w2_ref, b2_ref,              # (128, 256) bf16, (128, 1) f32
                 w3_ref, b3_ref,              # (8, 128)  bf16, (8, 1)  f32
                 out_ref):                    # (2, TB)  f32
    x = x_ref[...]                            # (4, TB) f32
    s0 = x[0:1, :]                            # (1, TB)  == state[:, 0] (exact f32)

    # fused layer 1 (both branches, bias folded): relu(W1aug @ x_aug)  (256, TB)
    h = jnp.dot(w1_ref[...], x.astype(jnp.bfloat16),
                preferred_element_type=jnp.float32)
    h = jnp.maximum(h, 0.0)
    # fused layer 2 (block-diagonal): relu(W2_all @ h + b2_all)        (128, TB)
    h = jnp.dot(w2_ref[...], h.astype(jnp.bfloat16),
                preferred_element_type=jnp.float32) + b2_ref[...]
    h = jnp.maximum(h, 0.0)
    # fused layer 3 (block-diagonal, padded to 8 rows)                 (8, TB)
    z = jnp.dot(w3_ref[...], h.astype(jnp.bfloat16),
                preferred_element_type=jnp.float32) + b3_ref[...]
    y = 1.0 / (1.0 + jnp.exp(-z))             # rows 0-1: nz, rows 2-5: th

    # nz branch normalize:  nz / sum(nz) * state[:, 0]
    nz0 = y[0:1, :]
    nz1 = y[1:2, :]
    inv = pl.reciprocal(nz0 + nz1)            # exact reciprocal (sigmoid > 0)
    nz_out0 = nz0 * inv * s0
    nz_out1 = nz1 * inv * s0

    # th branch: pairwise sort == (min, max) of each 2-element slice
    t0 = y[2:3, :]
    t1 = y[3:4, :]
    t2 = y[4:5, :]
    t3 = y[5:6, :]
    lo0 = jnp.minimum(t0, t1)
    hi0 = jnp.maximum(t0, t1)
    lo1 = jnp.minimum(t2, t3)
    hi1 = jnp.maximum(t2, t3)

    sum_lo = lo0 + lo1                        # sum(th_out[:, [0, 2]], 1)
    sum_hi = hi0 + hi1                        # sum(th_out[:, [1, 3]], 1)

    # knife-edge behavior at equality (all masks zero) matches the PyTorch ref
    c1 = (s0 < sum_lo).astype(jnp.float32)
    c2 = (s0 > sum_hi).astype(jnp.float32)
    c3 = jnp.logical_and(s0 > sum_lo, s0 < sum_hi).astype(jnp.float32)

    # direct row stores (sublane writes), lane-dense output
    out_ref[0:1, :] = c1 * lo0 + c2 * hi0 + c3 * nz_out0
    out_ref[1:2, :] = c1 * lo1 + c2 * hi1 + c3 * nz_out1


# ----------------------------------------------------------------------------
# One-time weight fusion (call once; pass the result into actor_forward).
# ----------------------------------------------------------------------------
def fuse_params(p):
    """Transposed, branch-fused (block-diagonal) bf16 weights, f32 biases.

    Weight storage in `p` is (in_features, out_features), i.e. y = x @ W + b.
    """
    f32 = jnp.float32
    # layer 1: rows 0-127 = nz (all 3 features); rows 128-255 = th (features
    # 1,2 only -> zero column for feature 0).  Bias folded as a 4th column.
    w1_nz = p["w1"].T                                                 # (128, 3)
    w1_th = jnp.concatenate([jnp.zeros((HIDDEN1, 1), f32), p["w1t"].T], axis=1)
    w1_all = jnp.concatenate([w1_nz, w1_th], axis=0)                  # (256, 3)
    b1_all = jnp.concatenate([p["b1"], p["b1t"]], axis=1).T           # (256, 1)
    w1_aug = jnp.concatenate([w1_all, b1_all], axis=1)                # (256, 4)

    w2_all = jnp.zeros((2 * HIDDEN2, 2 * HIDDEN1), f32)
    w2_all = w2_all.at[:HIDDEN2, :HIDDEN1].set(p["w2"].T)
    w2_all = w2_all.at[HIDDEN2:, HIDDEN1:].set(p["w2t"].T)            # (128, 256)
    b2_all = jnp.concatenate([p["b2"], p["b2t"]], axis=1).T           # (128, 1)

    w3_all = jnp.zeros((OUT3, 2 * HIDDEN2), f32)
    w3_all = w3_all.at[:ACTION_DIM, :HIDDEN2].set(p["w3"].T)
    w3_all = w3_all.at[ACTION_DIM:3 * ACTION_DIM, HIDDEN2:].set(p["w3t"].T)
    b3_all = jnp.zeros((OUT3, 1), f32)
    b3_all = b3_all.at[:ACTION_DIM, :].set(p["b3"].T)
    b3_all = b3_all.at[ACTION_DIM:3 * ACTION_DIM, :].set(p["b3t"].T)  # (8, 1)

    return (w1_aug.astype(jnp.bfloat16),
            w2_all.astype(jnp.bfloat16), b2_all,
            w3_all.astype(jnp.bfloat16), b3_all)


# ----------------------------------------------------------------------------
# Forward wrapper.
# ----------------------------------------------------------------------------
def _pick_tile(batch):
    """Batch tile: up to 2048 lanes; keep >= 2 grid steps when batch allows
    (v7x has 2 TensorCores and the batch axis is 'parallel')."""
    b_ceil = pl.cdiv(max(batch, 1), 128) * 128
    tb = b_ceil if b_ceil < 256 else b_ceil // 2
    tb = min(2048, tb)
    return max(128, (tb // 128) * 128)


def actor_forward(state, fused, tb=None):
    """state: any shape reshapeable to (-1, 3); fused: output of fuse_params.
    Returns (B, ACTION_DIM) float32."""
    state = state.reshape(-1, STATES_DIM).astype(jnp.float32)
    B = state.shape[0]
    if tb is None:
        tb = _pick_tile(B)
    assert tb % 128 == 0, "batch tile must be a multiple of the 128-lane width"
    b_pad = pl.cdiv(max(B, 1), tb) * tb

    # (4, b_pad): state^T plus a ones row (folds layer-1 bias into the matmul).
    x_aug = jnp.concatenate([state.T, jnp.ones((1, B), jnp.float32)], axis=0)
    x_aug = jnp.pad(x_aug, ((0, 0), (0, b_pad - B)))

    def w_spec(shape):
        # full-array block, constant index_map -> VMEM-resident across the grid
        return pl.BlockSpec(shape, lambda i: (0, 0))

    in_specs = [pl.BlockSpec((STATES_DIM + 1, tb), lambda i: (0, i))] + \
               [w_spec(w.shape) for w in fused]
    out_spec = pl.BlockSpec((ACTION_DIM, tb), lambda i: (0, i))

    cost = pl.CostEstimate(
        flops=2 * (256 * 4 + 128 * 256 + 8 * 128) * b_pad,
        transcendentals=8 * b_pad,
        bytes_accessed=24 * b_pad + 70_176)

    out_t = pl.pallas_call(
        actor_kernel,
        out_shape=jax.ShapeDtypeStruct((ACTION_DIM, b_pad), jnp.float32),
        grid=(b_pad // tb,),
        in_specs=in_specs,
        out_specs=out_spec,
        compiler_params=pltpu.CompilerParams(
            dimension_semantics=("parallel",)),
        cost_estimate=cost,
    )(x_aug, *fused)
    return out_t[:, :B].T


# ----------------------------------------------------------------------------
# Init + references.
# ----------------------------------------------------------------------------
def init_params(key):
    ks = jax.random.split(key, 12)

    def uni(k, shape, bound):
        return jax.random.uniform(k, shape, jnp.float32, -bound, bound)

    def fanin_bound(fan):
        return 1.0 / float(jnp.sqrt(jnp.float32(fan)))

    p = {}
    # nz branch (weights stored (in, out))
    p["w1"] = uni(ks[0], (STATES_DIM, HIDDEN1), fanin_bound(HIDDEN1))
    p["b1"] = uni(ks[1], (1, HIDDEN1), fanin_bound(STATES_DIM))
    p["w2"] = uni(ks[2], (HIDDEN1, HIDDEN2), fanin_bound(HIDDEN2))
    p["b2"] = uni(ks[3], (1, HIDDEN2), fanin_bound(HIDDEN1))
    p["w3"] = uni(ks[4], (HIDDEN2, ACTION_DIM), INIT_W)
    p["b3"] = uni(ks[5], (1, ACTION_DIM), fanin_bound(HIDDEN2))
    # th branch
    p["w1t"] = uni(ks[6], (2, HIDDEN1), fanin_bound(HIDDEN1))
    p["b1t"] = uni(ks[7], (1, HIDDEN1), fanin_bound(2))
    p["w2t"] = uni(ks[8], (HIDDEN1, HIDDEN2), fanin_bound(HIDDEN2))
    p["b2t"] = uni(ks[9], (1, HIDDEN2), fanin_bound(HIDDEN1))
    p["w3t"] = uni(ks[10], (HIDDEN2, ACTION_DIM * 2), INIT_W)
    p["b3t"] = uni(ks[11], (1, ACTION_DIM * 2), fanin_bound(HIDDEN2))
    return p


def actor_ref_fused(state, fused):
    """Pure-JAX reference mirroring the PyTorch forward, using the same fused
    bf16 weights / f32-accumulate numerics as the kernel."""
    w1a, w2, b2, w3, b3 = fused
    x = state.reshape(-1, STATES_DIM).astype(jnp.float32)
    B = x.shape[0]
    s0 = x[:, 0:1]
    xa = jnp.concatenate([x, jnp.ones((B, 1), jnp.float32)], axis=1)
    h = jnp.dot(xa.astype(jnp.bfloat16), w1a.T, preferred_element_type=jnp.float32)
    h = jnp.maximum(h, 0.0)
    h = jnp.dot(h.astype(jnp.bfloat16), w2.T, preferred_element_type=jnp.float32) + b2[:, 0]
    h = jnp.maximum(h, 0.0)
    z = jnp.dot(h.astype(jnp.bfloat16), w3.T, preferred_element_type=jnp.float32) + b3[:, 0]
    y = 1.0 / (1.0 + jnp.exp(-z))

    nz = y[:, :2]
    th = y[:, 2:6]
    nz_out = nz / jnp.sum(nz, axis=1, keepdims=True) * s0
    lo = jnp.minimum(th[:, [0, 2]], th[:, [1, 3]])   # sorted pair minima
    hi = jnp.maximum(th[:, [0, 2]], th[:, [1, 3]])   # sorted pair maxima
    c1 = (s0[:, 0] < lo.sum(1))[:, None]
    c2 = (s0[:, 0] > hi.sum(1))[:, None]
    c3 = ((s0[:, 0] > lo.sum(1)) & (s0[:, 0] < hi.sum(1)))[:, None]
    return c1 * lo + c2 * hi + c3 * nz_out


# Exact-f32 PyTorch-mirror reference (differs from the kernel only by the bf16
# weight quantization; kept for documentation / offline validation).
def actor_ref_f32(state, p):
    state = state.reshape(-1, STATES_DIM).astype(jnp.float32)

    def lin(x, w, b):
        return x @ w + b[0]

    nz = jnp.maximum(lin(state, p["w1"], p["b1"]), 0.0)
    nz = jnp.maximum(lin(nz, p["w2"], p["b2"]), 0.0)
    nz = 1.0 / (1.0 + jnp.exp(-lin(nz, p["w3"], p["b3"])))
    nz_out = nz / jnp.sum(nz, axis=1, keepdims=True) * state[:, 0:1]

    th = jnp.maximum(lin(state[:, 1:], p["w1t"], p["b1t"]), 0.0)
    th = jnp.maximum(lin(th, p["w2t"], p["b2t"]), 0.0)
    th = 1.0 / (1.0 + jnp.exp(-lin(th, p["w3t"], p["b3t"])))
    th_out = jnp.concatenate(
        [jnp.sort(th[:, :2], axis=1), jnp.sort(th[:, 2:], axis=1)], axis=1)

    s0 = state[:, 0]
    lo = th_out[:, [0, 2]]
    hi = th_out[:, [1, 3]]
    c1 = (s0 < lo.sum(1))[:, None]
    c2 = (s0 > hi.sum(1))[:, None]
    c3 = ((s0 > lo.sum(1)) & (s0 < hi.sum(1)))[:, None]
    return c1 * lo + c2 * hi + c3 * nz_out


if __name__ == "__main__":
    key = jax.random.PRNGKey(0)
    k_param, k_state = jax.random.split(key)
    params = init_params(k_param)

    # Weight fusion hoisted out of the forward path: built once, reused.
    fused = fuse_params(params)
    fused = tuple(jax.block_until_ready(w) for w in fused)

    fwd = jax.jit(actor_forward, static_argnames=("tb",))

    # Small deterministic checks: B=8 (single tile) and B=200 (2-step batch
    # grid with a ragged tail).  State values in [0, 2).
    for bsz in (8, 200):
        ks = jax.random.fold_in(k_state, bsz)
        state = jax.random.uniform(ks, (bsz, STATES_DIM), jnp.float32, 0.0, 2.0)

        out = jax.block_until_ready(fwd(state, fused))
        ref = actor_ref_fused(state, fused)

        assert out.shape == (bsz, ACTION_DIM)
        max_err = float(jnp.max(jnp.abs(out - ref)))
        assert jnp.allclose(out, ref, atol=1e-3, rtol=1e-3), (bsz, max_err)

    print("KERNEL_OK")
</pallas_src>

<mosaic_0001>
module attributes {stable_mosaic.version = 11 : i64} {
  func.func @actor_kernel(%arg0: i32, %arg1: memref<4x128xf32, #tpu.memory_space<vmem>>, %arg2: memref<256x4xbf16, #tpu.memory_space<vmem>>, %arg3: memref<128x256xbf16, #tpu.memory_space<vmem>>, %arg4: memref<128x1xf32, #tpu.memory_space<vmem>>, %arg5: memref<8x128xbf16, #tpu.memory_space<vmem>>, %arg6: memref<8x1xf32, #tpu.memory_space<vmem>>, %arg7: memref<2x128xf32, #tpu.memory_space<vmem>>) attributes {dimension_semantics = [#tpu.dimension_semantics<parallel>], iteration_bounds = array<i64: 1>, scalar_prefetch = 0 : i64, scratch_operands = 0 : i64, tpu.core_type = #tpu.core_type<tc>, window_params = [{transform_indices = @transform_0, window_bounds = array<i64: 4, 128>}, {pipeline_mode = #tpu.pipeline_mode<synchronous>, transform_indices = @transform_1, window_bounds = array<i64: 256, 4>}, {pipeline_mode = #tpu.pipeline_mode<synchronous>, transform_indices = @transform_2, window_bounds = array<i64: 128, 256>}, {pipeline_mode = #tpu.pipeline_mode<synchronous>, transform_indices = @transform_3, window_bounds = array<i64: 128, 1>}, {pipeline_mode = #tpu.pipeline_mode<synchronous>, transform_indices = @transform_4, window_bounds = array<i64: 8, 128>}, {pipeline_mode = #tpu.pipeline_mode<synchronous>, transform_indices = @transform_5, window_bounds = array<i64: 8, 1>}, {transform_indices = @transform_6, window_bounds = array<i64: 2, 128>}]} {
    %c0 = arith.constant 0 : index
    %c0_0 = arith.constant 0 : index
    %0 = vector.load %arg1[%c0, %c0_0] : memref<4x128xf32, #tpu.memory_space<vmem>>, vector<4x128xf32>
    %1 = vector.extract_strided_slice %0 {offsets = [0, 0], sizes = [1, 128], strides = [1, 1]} : vector<4x128xf32> to vector<1x128xf32>
    %c0_1 = arith.constant 0 : index
    %c0_2 = arith.constant 0 : index
    %2 = vector.load %arg2[%c0_1, %c0_2] : memref<256x4xbf16, #tpu.memory_space<vmem>>, vector<256x4xbf16>
    %3 = arith.truncf %0 : vector<4x128xf32> to vector<4x128xbf16>
    %cst = arith.constant dense<0.000000e+00> : vector<256x128xf32>
    %4 = tpu.matmul %2, %3, %cst {dimension_numbers = #tpu.dot_dimension_numbers<[1], [0], [0], [1], [0, 0, 1, 1], [], []>} : vector<256x4xbf16>, vector<4x128xbf16>, vector<256x128xf32> -> vector<256x128xf32>
    %cst_3 = arith.constant 0.000000e+00 : f32
    %5 = vector.broadcast %cst_3 : f32 to vector<256x128xf32>
    %6 = arith.maximumf %4, %5 : vector<256x128xf32>
    %c0_4 = arith.constant 0 : index
    %c0_5 = arith.constant 0 : index
    %7 = vector.load %arg3[%c0_4, %c0_5] : memref<128x256xbf16, #tpu.memory_space<vmem>>, vector<128x256xbf16>
    %8 = arith.truncf %6 : vector<256x128xf32> to vector<256x128xbf16>
    %cst_6 = arith.constant dense<0.000000e+00> : vector<128x128xf32>
    %9 = tpu.matmul %7, %8, %cst_6 {dimension_numbers = #tpu.dot_dimension_numbers<[1], [0], [0], [1], [0, 0, 1, 1], [], []>} : vector<128x256xbf16>, vector<256x128xbf16>, vector<128x128xf32> -> vector<128x128xf32>
    %c0_7 = arith.constant 0 : index
    %c0_8 = arith.constant 0 : index
    %10 = vector.load %arg4[%c0_7, %c0_8] : memref<128x1xf32, #tpu.memory_space<vmem>>, vector<128x1xf32>
    %11 = vector.broadcast %10 : vector<128x1xf32> to vector<128x128xf32>
    %12 = arith.addf %9, %11 : vector<128x128xf32>
    %cst_9 = arith.constant 0.000000e+00 : f32
    %13 = vector.broadcast %cst_9 : f32 to vector<128x128xf32>
    %14 = arith.maximumf %12, %13 : vector<128x128xf32>
    %c0_10 = arith.constant 0 : index
    %c0_11 = arith.constant 0 : index
    %15 = vector.load %arg5[%c0_10, %c0_11] : memref<8x128xbf16, #tpu.memory_space<vmem>>, vector<8x128xbf16>
    %16 = arith.truncf %14 : vector<128x128xf32> to vector<128x128xbf16>
    %cst_12 = arith.constant dense<0.000000e+00> : vector<8x128xf32>
    %17 = tpu.matmul %15, %16, %cst_12 {dimension_numbers = #tpu.dot_dimension_numbers<[1], [0], [0], [1], [0, 0, 1, 1], [], []>} : vector<8x128xbf16>, vector<128x128xbf16>, vector<8x128xf32> -> vector<8x128xf32>
    %c0_13 = arith.constant 0 : index
    %c0_14 = arith.constant 0 : index
    %18 = vector.load %arg6[%c0_13, %c0_14] : memref<8x1xf32, #tpu.memory_space<vmem>>, vector<8x1xf32>
    %19 = vector.broadcast %18 : vector<8x1xf32> to vector<8x128xf32>
    %20 = arith.addf %17, %19 : vector<8x128xf32>
    %cst_15 = arith.constant 0.000000e+00 : f32
    %21 = vector.broadcast %cst_15 : f32 to vector<8x128xf32>
    %22 = arith.subf %21, %20 : vector<8x128xf32>
    %23 = math.exp %22 : vector<8x128xf32>
    %cst_16 = arith.constant 1.000000e+00 : f32
    %24 = vector.broadcast %cst_16 : f32 to vector<8x128xf32>
    %25 = arith.addf %24, %23 : vector<8x128xf32>
    %cst_17 = arith.constant 1.000000e+00 : f32
    %26 = vector.broadcast %cst_17 : f32 to vector<8x128xf32>
    %27 = arith.divf %26, %25 : vector<8x128xf32>
    %28 = vector.extract_strided_slice %27 {offsets = [0, 0], sizes = [1, 128], strides = [1, 1]} : vector<8x128xf32> to vector<1x128xf32>
    %29 = vector.extract_strided_slice %27 {offsets = [1, 0], sizes = [1, 128], strides = [1, 1]} : vector<8x128xf32> to vector<1x128xf32>
    %30 = arith.addf %28, %29 : vector<1x128xf32>
    %31 = tpu.reciprocal %30 : vector<1x128xf32> -> vector<1x128xf32>
    %32 = arith.mulf %28, %31 : vector<1x128xf32>
    %33 = arith.mulf %32, %1 : vector<1x128xf32>
    %34 = arith.mulf %29, %31 : vector<1x128xf32>
    %35 = arith.mulf %34, %1 : vector<1x128xf32>
    %36 = vector.extract_strided_slice %27 {offsets = [2, 0], sizes = [1, 128], strides = [1, 1]} : vector<8x128xf32> to vector<1x128xf32>
    %37 = vector.extract_strided_slice %27 {offsets = [3, 0], sizes = [1, 128], strides = [1, 1]} : vector<8x128xf32> to vector<1x128xf32>
    %38 = vector.extract_strided_slice %27 {offsets = [4, 0], sizes = [1, 128], strides = [1, 1]} : vector<8x128xf32> to vector<1x128xf32>
    %39 = vector.extract_strided_slice %27 {offsets = [5, 0], sizes = [1, 128], strides = [1, 1]} : vector<8x128xf32> to vector<1x128xf32>
    %40 = arith.minimumf %36, %37 : vector<1x128xf32>
    %41 = arith.maximumf %36, %37 : vector<1x128xf32>
    %42 = arith.minimumf %38, %39 : vector<1x128xf32>
    %43 = arith.maximumf %38, %39 : vector<1x128xf32>
    %44 = arith.addf %40, %42 : vector<1x128xf32>
    %45 = arith.addf %41, %43 : vector<1x128xf32>
    %46 = arith.cmpf olt, %1, %44 : vector<1x128xf32>
    %47 = arith.extui %46 : vector<1x128xi1> to vector<1x128xi32>
    %48 = arith.sitofp %47 : vector<1x128xi32> to vector<1x128xf32>
    %49 = arith.cmpf ogt, %1, %45 : vector<1x128xf32>
    %50 = arith.extui %49 : vector<1x128xi1> to vector<1x128xi32>
    %51 = arith.sitofp %50 : vector<1x128xi32> to vector<1x128xf32>
    %52 = arith.cmpf ogt, %1, %44 : vector<1x128xf32>
    %53 = arith.cmpf olt, %1, %45 : vector<1x128xf32>
    %54 = arith.andi %52, %53 : vector<1x128xi1>
    %55 = arith.extui %54 : vector<1x128xi1> to vector<1x128xi32>
    %56 = arith.sitofp %55 : vector<1x128xi32> to vector<1x128xf32>
    %57 = arith.mulf %48, %40 : vector<1x128xf32>
    %58 = arith.mulf %51, %41 : vector<1x128xf32>
    %59 = arith.addf %57, %58 : vector<1x128xf32>
    %60 = arith.mulf %56, %33 : vector<1x128xf32>
    %61 = arith.addf %59, %60 : vector<1x128xf32>
    %c0_18 = arith.constant 0 : index
    %c0_19 = arith.constant 0 : index
    %62 = vector.load %arg7[%c0_18, %c0_19] : memref<2x128xf32, #tpu.memory_space<vmem>>, vector<1x128xf32>
    tpu.vector_store %arg7[%c0_18, %c0_19], %61 {strides = array<i32>} : memref<2x128xf32, #tpu.memory_space<vmem>>, vector<1x128xf32>,
    %63 = arith.mulf %48, %42 : vector<1x128xf32>
    %64 = arith.mulf %51, %43 : vector<1x128xf32>
    %65 = arith.addf %63, %64 : vector<1x128xf32>
    %66 = arith.mulf %56, %35 : vector<1x128xf32>
    %67 = arith.addf %65, %66 : vector<1x128xf32>
    %c1 = arith.constant 1 : index
    %c0_20 = arith.constant 0 : index
    %68 = vector.load %arg7[%c1, %c0_20] : memref<2x128xf32, #tpu.memory_space<vmem>>, vector<1x128xf32>
    tpu.vector_store %arg7[%c1, %c0_20], %67 {strides = array<i32>} : memref<2x128xf32, #tpu.memory_space<vmem>>, vector<1x128xf32>,
    return
  }
  func.func @transform_0(%arg0: i32) -> (i32, i32) {
    %c0_i32 = arith.constant 0 : i32
    %c0_i32_0 = arith.constant 0 : i32
    return %c0_i32, %arg0 : i32, i32
  }
  func.func @transform_1(%arg0: i32) -> (i32, i32) {
    %c0_i32 = arith.constant 0 : i32
    %c0_i32_0 = arith.constant 0 : i32
    %c0_i32_1 = arith.constant 0 : i32
    return %c0_i32, %c0_i32_0 : i32, i32
  }
  func.func @transform_2(%arg0: i32) -> (i32, i32) {
    %c0_i32 = arith.constant 0 : i32
    %c0_i32_0 = arith.constant 0 : i32
    %c0_i32_1 = arith.constant 0 : i32
    return %c0_i32, %c0_i32_0 : i32, i32
  }
  func.func @transform_3(%arg0: i32) -> (i32, i32) {
    %c0_i32 = arith.constant 0 : i32
    %c0_i32_0 = arith.constant 0 : i32
    %c0_i32_1 = arith.constant 0 : i32
    return %c0_i32, %c0_i32_0 : i32, i32
  }
  func.func @transform_4(%arg0: i32) -> (i32, i32) {
    %c0_i32 = arith.constant 0 : i32
    %c0_i32_0 = arith.constant 0 : i32
    %c0_i32_1 = arith.constant 0 : i32
    return %c0_i32, %c0_i32_0 : i32, i32
  }
  func.func @transform_5(%arg0: i32) -> (i32, i32) {
    %c0_i32 = arith.constant 0 : i32
    %c0_i32_0 = arith.constant 0 : i32
    %c0_i32_1 = arith.constant 0 : i32
    return %c0_i32, %c0_i32_0 : i32, i32
  }
  func.func @transform_6(%arg0: i32) -> (i32, i32) {
    %c0_i32 = arith.constant 0 : i32
    %c0_i32_0 = arith.constant 0 : i32
    return %c0_i32, %arg0 : i32, i32
  }
}

</mosaic_0001>

<llo_original>
// kernel: actor_forward.1
$region0: #{actor_forward.1}
  #allocation0 [shape = 'u32[]', space=smem, size = 0x4, offset = 0x4, fixed_abs, tag = 'smem constant byte address 0x4 - core index']
  #allocation1 [shape = 'u32[72,128]{1,0:T(1,128)}', space=vmem, size = 0x9000, scoped, tag = 'internal scratch']
  %s0 = inlined_call_operand.vmem [shape: f32[4,128], index: 0, kind: input, shape index: {}]
  %s1 = inlined_call_operand.vmem [shape: bf16[256,4], index: 1, kind: input, shape index: {}]
  %s2 = inlined_call_operand.vmem [shape: bf16[128,256], index: 2, kind: input, shape index: {}]
  %s3 = inlined_call_operand.vmem [shape: f32[128,1], index: 3, kind: input, shape index: {}]
  %s4 = inlined_call_operand.vmem [shape: bf16[8,128], index: 4, kind: input, shape index: {}]
  %s5 = inlined_call_operand.vmem [shape: f32[8,1], index: 5, kind: input, shape index: {}]
  %s6 = inlined_call_operand.vmem [shape: f32[2,128], index: 6, kind: output, shape index: {}]
  %s7 = sld [smem:[#allocation0]]
  $region34: #{actor_forward.1} parent=0
    _
  %s9 = ssub.s32 1, %s7
  %s10 = scalar_select 0, %s9, %s7
  // Predicated region
  $region2: #{actor_forward.1} parent=0 // pred_check
    _
  $region3: #{actor_forward.1} parent=0 // pred_check_branch
    %12 = sbr.rel (0) target = $region5
  $region4: #{actor_forward.1} parent=0 // pred_region
    _
  $region5: #{actor_forward.1} parent=0 // pred_fallthru
    _
  // Predicated region
  $region6: #{actor_forward.1} parent=0 // pred_check
    _
  $region7: #{actor_forward.1} parent=0 // pred_check_branch
    %14 = sbr.rel (0) target = $region9
  $region8: #{actor_forward.1} parent=0 // pred_region
    _
  $region9: #{actor_forward.1} parent=0 // pred_fallthru
    _
  // Predicated region
  $region10: #{actor_forward.1} parent=0 // pred_check
    _
  $region11: #{actor_forward.1} parent=0 // pred_check_branch
    %16 = sbr.rel (0) target = $region13
  $region12: #{actor_forward.1} parent=0 // pred_region
    _
  $region13: #{actor_forward.1} parent=0 // pred_fallthru
    _
  // Predicated region
  $region14: #{actor_forward.1} parent=0 // pred_check
    _
  $region15: #{actor_forward.1} parent=0 // pred_check_branch
    %18 = sbr.rel (0) target = $region17
  $region16: #{actor_forward.1} parent=0 // pred_region
    _
  $region17: #{actor_forward.1} parent=0 // pred_fallthru
    _
  // Predicated region
  $region18: #{actor_forward.1} parent=0 // pred_check
    _
  $region19: #{actor_forward.1} parent=0 // pred_check_branch
    %20 = sbr.rel (0) target = $region21
  $region20: #{actor_forward.1} parent=0 // pred_region
    _
  $region21: #{actor_forward.1} parent=0 // pred_fallthru
    _
  // Predicated region
  $region22: #{actor_forward.1} parent=0 // pred_check
    _
  $region23: #{actor_forward.1} parent=0 // pred_check_branch
    %22 = sbr.rel (0) target = $region25
  $region24: #{actor_forward.1} parent=0 // pred_region
    _
  $region25: #{actor_forward.1} parent=0 // pred_fallthru
    _
  %v24 = vld [vmem:[%s0] sm:$0xf]
  %v25 = vld [vmem:[%s1] sm:$0xf]
  %v26 = vld [vmem:[%s1 + $0x4] sm:$0xf]
  %v27 = vld [vmem:[%s1 + $0x8] sm:$0xf]
  %v28 = vld [vmem:[%s1 + $0xc] sm:$0xf]
  %v29 = vld [vmem:[%s1 + $0x10] sm:$0xf]
  %v30 = vld [vmem:[%s1 + $0x14] sm:$0xf]
  %v31 = vld [vmem:[%s1 + $0x18] sm:$0xf]
  %v32 = vld [vmem:[%s1 + $0x1c] sm:$0xf]
  %v33 = vld [vmem:[%s1 + $0x20] sm:$0xf]
  %v34 = vld [vmem:[%s1 + $0x24] sm:$0xf]
  %v35 = vld [vmem:[%s1 + $0x28] sm:$0xf]
  %v36 = vld [vmem:[%s1 + $0x2c] sm:$0xf]
  %v37 = vld [vmem:[%s1 + $0x30] sm:$0xf]
  %v38 = vld [vmem:[%s1 + $0x34] sm:$0xf]
  %v39 = vld [vmem:[%s1 + $0x38] sm:$0xf]
  %v40 = vld [vmem:[%s1 + $0x3c] sm:$0xf]
  %v41 = vld [vmem:[%s1 + $0x40] sm:$0xf]
  %v42 = vld [vmem:[%s1 + $0x44] sm:$0xf]
  %v43 = vld [vmem:[%s1 + $0x48] sm:$0xf]
  %v44 = vld [vmem:[%s1 + $0x4c] sm:$0xf]
  %v45 = vld [vmem:[%s1 + $0x50] sm:$0xf]
  %v46 = vld [vmem:[%s1 + $0x54] sm:$0xf]
  %v47 = vld [vmem:[%s1 + $0x58] sm:$0xf]
  %v48 = vld [vmem:[%s1 + $0x5c] sm:$0xf]
  %v49 = vld [vmem:[%s1 + $0x60] sm:$0xf]
  %v50 = vld [vmem:[%s1 + $0x64] sm:$0xf]
  %v51 = vld [vmem:[%s1 + $0x68] sm:$0xf]
  %v52 = vld [vmem:[%s1 + $0x6c] sm:$0xf]
  %v53 = vld [vmem:[%s1 + $0x70] sm:$0xf]
  %v54 = vld [vmem:[%s1 + $0x74] sm:$0xf]
  %v55 = vld [vmem:[%s1 + $0x78] sm:$0xf]
  %v56 = vld [vmem:[%s1 + $0x7c] sm:$0xf]
  %v57 = vpack.c.bf16 %v24, %v24
  %v90 = vunpack.c.l.b16 %v25
  %v91 = vunpack.c.l.b16 %v26
  %v92 = vunpack.c.l.b16 %v27
  %v93 = vunpack.c.l.b16 %v28
  %v94 = vunpack.c.l.b16 %v29
  %v95 = vunpack.c.l.b16 %v30
  %v96 = vunpack.c.l.b16 %v31
  %v97 = vunpack.c.l.b16 %v32
  %v98 = vunpack.c.l.b16 %v33
  %v99 = vunpack.c.l.b16 %v34
  %v100 = vunpack.c.l.b16 %v35
  %v101 = vunpack.c.l.b16 %v36
  %v102 = vunpack.c.l.b16 %v37
  %v103 = vunpack.c.l.b16 %v38
  %v104 = vunpack.c.l.b16 %v39
  %v105 = vunpack.c.l.b16 %v40
  %v106 = vunpack.c.l.b16 %v41
  %v107 = vunpack.c.l.b16 %v42
  %v108 = vunpack.c.l.b16 %v43
  %v109 = vunpack.c.l.b16 %v44
  %v110 = vunpack.c.l.b16 %v45
  %v111 = vunpack.c.l.b16 %v46
  %v112 = vunpack.c.l.b16 %v47
  %v113 = vunpack.c.l.b16 %v48
  %v114 = vunpack.c.l.b16 %v49
  %v115 = vunpack.c.l.b16 %v50
  %v116 = vunpack.c.l.b16 %v51
  %v117 = vunpack.c.l.b16 %v52
  %v118 = vunpack.c.l.b16 %v53
  %v119 = vunpack.c.l.b16 %v54
  %v120 = vunpack.c.l.b16 %v55
  %v121 = vunpack.c.l.b16 %v56
  %v122 = vpack.c.b16 %v91, %v90
  %v123 = vpack.c.b16 %v93, %v92
  %v124 = vpack.c.b16 %v95, %v94
  %v125 = vpack.c.b16 %v97, %v96
  %v126 = vpack.c.b16 %v99, %v98
  %v127 = vpack.c.b16 %v101, %v100
  %v128 = vpack.c.b16 %v103, %v102
  %v129 = vpack.c.b16 %v105, %v104
  %v130 = vpack.c.b16 %v107, %v106
  %v131 = vpack.c.b16 %v109, %v108
  %v132 = vpack.c.b16 %v111, %v110
  %v133 = vpack.c.b16 %v113, %v112
  %v134 = vpack.c.b16 %v115, %v114
  %v135 = vpack.c.b16 %v117, %v116
  %v136 = vpack.c.b16 %v119, %v118
  %v137 = vpack.c.b16 %v121, %v120
  %vm138 = vcmask 31744
  %v140 = vsel %vm138, %v122, 0
  %v143 = vsel %vm138, %v123, 0
  %v146 = vsel %vm138, %v124, 0
  %v149 = vsel %vm138, %v125, 0
  %v152 = vsel %vm138, %v126, 0
  %v155 = vsel %vm138, %v127, 0
  %v158 = vsel %vm138, %v128, 0
  %v161 = vsel %vm138, %v129, 0
  %v164 = vsel %vm138, %v130, 0
  %v167 = vsel %vm138, %v131, 0
  %v170 = vsel %vm138, %v132, 0
  %v173 = vsel %vm138, %v133, 0
  %v176 = vsel %vm138, %v134, 0
  %v179 = vsel %vm138, %v135, 0
  %v182 = vsel %vm138, %v136, 0
  %v185 = vsel %vm138, %v137, 0
  %vm187 = vcmask 1041408
  %v189 = vsel %vm187, %v57, 0
  %191 = vmatpush.bf16.msra.mxu0 0
  %192 = vmatpush.bf16.msra.mxu0 0
  %193 = vmatpush.bf16.msra.mxu0 0
  %194 = vmatpush.bf16.msra.mxu0 0
  %195 = vmatpush.bf16.msra.mxu0 0
  %196 = vmatpush.bf16.msra.mxu0 0
  %197 = vmatpush.bf16.msra.mxu0 0
  %198 = vmatpush.bf16.msra.mxu0 %v189
  %199 = vmatmul.bf16.gmra.mxu0 %v140
  %v200 = vpop.f32.mrf.mxu0
  %v201 = vadd.f32 0.0, %v200
  %v202 = vpop.f32.mrf.mxu0
  %v203 = vadd.f32 0.0, %v202
  %204 = vmatmul.bf16.gmra.mxu0 %v143
  %v205 = vpop.f32.mrf.mxu0
  %v206 = vadd.f32 0.0, %v205
  %v207 = vpop.f32.mrf.mxu0
  %v208 = vadd.f32 0.0, %v207
  %209 = vmatmul.bf16.gmra.mxu0 %v146
  %v210 = vpop.f32.mrf.mxu0
  %v211 = vadd.f32 0.0, %v210
  %v212 = vpop.f32.mrf.mxu0
  %v213 = vadd.f32 0.0, %v212
  %214 = vmatmul.bf16.gmra.mxu0 %v149
  %v215 = vpop.f32.mrf.mxu0
  %v216 = vadd.f32 0.0, %v215
  %v217 = vpop.f32.mrf.mxu0
  %v218 = vadd.f32 0.0, %v217
  %219 = vmatmul.bf16.gmra.mxu0 %v152
  %v220 = vpop.f32.mrf.mxu0
  %v221 = vadd.f32 0.0, %v220
  %v222 = vpop.f32.mrf.mxu0
  %v223 = vadd.f32 0.0, %v222
  %224 = vmatmul.bf16.gmra.mxu0 %v155
  %v225 = vpop.f32.mrf.mxu0
  %v226 = vadd.f32 0.0, %v225
  %v227 = vpop.f32.mrf.mxu0
  %v228 = vadd.f32 0.0, %v227
  %229 = vmatmul.bf16.gmra.mxu0 %v158
  %v230 = vpop.f32.mrf.mxu0
  %v231 = vadd.f32 0.0, %v230
  %v232 = vpop.f32.mrf.mxu0
  %v233 = vadd.f32 0.0, %v232
  %234 = vmatmul.bf16.gmra.mxu0 %v161
  %v235 = vpop.f32.mrf.mxu0
  %v236 = vadd.f32 0.0, %v235
  %v237 = vpop.f32.mrf.mxu0
  %v238 = vadd.f32 0.0, %v237
  %239 = vmatmul.bf16.gmra.mxu0 %v164
  %v240 = vpop.f32.mrf.mxu0
  %v241 = vadd.f32 0.0, %v240
  %v242 = vpop.f32.mrf.mxu0
  %v243 = vadd.f32 0.0, %v242
  %244 = vmatmul.bf16.gmra.mxu0 %v167
  %v245 = vpop.f32.mrf.mxu0
  %v246 = vadd.f32 0.0, %v245
  %v247 = vpop.f32.mrf.mxu0
  %v248 = vadd.f32 0.0, %v247
  %249 = vmatmul.bf16.gmra.mxu0 %v170
  %v250 = vpop.f32.mrf.mxu0
  %v251 = vadd.f32 0.0, %v250
  %v252 = vpop.f32.mrf.mxu0
  %v253 = vadd.f32 0.0, %v252
  %254 = vmatmul.bf16.gmra.mxu0 %v173
  %v255 = vpop.f32.mrf.mxu0
  %v256 = vadd.f32 0.0, %v255
  %v257 = vpop.f32.mrf.mxu0
  %v258 = vadd.f32 0.0, %v257
  %259 = vmatmul.bf16.gmra.mxu0 %v176
  %v260 = vpop.f32.mrf.mxu0
  %v261 = vadd.f32 0.0, %v260
  %v262 = vpop.f32.mrf.mxu0
  %v263 = vadd.f32 0.0, %v262
  %264 = vmatmul.bf16.gmra.mxu0 %v179
  %v265 = vpop.f32.mrf.mxu0
  %v266 = vadd.f32 0.0, %v265
  %v267 = vpop.f32.mrf.mxu0
  %v268 = vadd.f32 0.0, %v267
  %269 = vmatmul.bf16.gmra.mxu0 %v182
  %v270 = vpop.f32.mrf.mxu0
  %v271 = vadd.f32 0.0, %v270
  %v272 = vpop.f32.mrf.mxu0
  %v273 = vadd.f32 0.0, %v272
  %274 = vmatmul.bf16.gmra.mxu0 %v185
  %v275 = vpop.f32.mrf.mxu0
  %v276 = vadd.f32 0.0, %v275
  %v277 = vpop.f32.mrf.mxu0
  %v278 = vadd.f32 0.0, %v277
  %279 = vdwg.mxu0
  %v280 = vmax.f32 %v201, 0.0
  %v281 = vmax.f32 %v203, 0.0
  %v282 = vmax.f32 %v206, 0.0
  %v283 = vmax.f32 %v208, 0.0
  %v284 = vmax.f32 %v211, 0.0
  %v285 = vmax.f32 %v213, 0.0
  %v286 = vmax.f32 %v216, 0.0
  %v287 = vmax.f32 %v218, 0.0
  %v288 = vmax.f32 %v221, 0.0
  %v289 = vmax.f32 %v223, 0.0
  %v290 = vmax.f32 %v226, 0.0
  %v291 = vmax.f32 %v228, 0.0
  %v292 = vmax.f32 %v231, 0.0
  %v293 = vmax.f32 %v233, 0.0
  %v294 = vmax.f32 %v236, 0.0
  %v295 = vmax.f32 %v238, 0.0
  %v296 = vmax.f32 %v241, 0.0
  %v297 = vmax.f32 %v243, 0.0
  %v298 = vmax.f32 %v246, 0.0
  %v299 = vmax.f32 %v248, 0.0
  %v300 = vmax.f32 %v251, 0.0
  %v301 = vmax.f32 %v253, 0.0
  %v302 = vmax.f32 %v256, 0.0
  %v303 = vmax.f32 %v258, 0.0
  %v304 = vmax.f32 %v261, 0.0
  %v305 = vmax.f32 %v263, 0.0
  %v306 = vmax.f32 %v266, 0.0
  %v307 = vmax.f32 %v268, 0.0
  %v308 = vmax.f32 %v271, 0.0
  %v309 = vmax.f32 %v273, 0.0
  %v310 = vmax.f32 %v276, 0.0
  %v311 = vmax.f32 %v278, 0.0
  %v312 = vld [vmem:[%s2] sm:$0xff]
  %v313 = vld [vmem:[%s2 + $0x8] sm:$0xff]
  %v314 = vld [vmem:[%s2 + $0x10] sm:$0xff]
  %v315 = vld [vmem:[%s2 + $0x18] sm:$0xff]
  %v316 = vld [vmem:[%s2 + $0x20] sm:$0xff]
  %v317 = vld [vmem:[%s2 + $0x28] sm:$0xff]
  %v318 = vld [vmem:[%s2 + $0x30] sm:$0xff]
  %v319 = vld [vmem:[%s2 + $0x38] sm:$0xff]
  %v320 = vld [vmem:[%s2 + $0x40] sm:$0xff]
  %v321 = vld [vmem:[%s2 + $0x48] sm:$0xff]
  %v322 = vld [vmem:[%s2 + $0x50] sm:$0xff]
  %v323 = vld [vmem:[%s2 + $0x58] sm:$0xff]
  %v324 = vld [vmem:[%s2 + $0x60] sm:$0xff]
  %v325 = vld [vmem:[%s2 + $0x68] sm:$0xff]
  %v326 = vld [vmem:[%s2 + $0x70] sm:$0xff]
  %v327 = vld [vmem:[%s2 + $0x78] sm:$0xff]
  %v328 = vpack.c.bf16 %v281, %v280
  %v329 = vpack.c.bf16 %v283, %v282
  %v330 = vpack.c.bf16 %v285, %v284
  %v331 = vpack.c.bf16 %v287, %v286
  %v332 = vpack.c.bf16 %v289, %v288
  %v333 = vpack.c.bf16 %v291, %v290
  %v334 = vpack.c.bf16 %v293, %v292
  %v335 = vpack.c.bf16 %v295, %v294
  %v336 = vpack.c.bf16 %v297, %v296
  %v337 = vpack.c.bf16 %v299, %v298
  %v338 = vpack.c.bf16 %v301, %v300
  %v339 = vpack.c.bf16 %v303, %v302
  %v340 = vpack.c.bf16 %v305, %v304
  %v341 = vpack.c.bf16 %v307, %v306
  %v342 = vpack.c.bf16 %v309, %v308
  %v343 = vpack.c.bf16 %v311, %v310
  %v344 = vld [vmem:[%s3] sm:$0xff]
  %v345 = vld [vmem:[%s3 + $0x8] sm:$0xff]
  %v346 = vld [vmem:[%s3 + $0x10] sm:$0xff]
  %v347 = vld [vmem:[%s3 + $0x18] sm:$0xff]
  %v348 = vld [vmem:[%s3 + $0x20] sm:$0xff]
  %v349 = vld [vmem:[%s3 + $0x28] sm:$0xff]
  %v350 = vld [vmem:[%s3 + $0x30] sm:$0xff]
  %v351 = vld [vmem:[%s3 + $0x38] sm:$0xff]
  %v352 = vld [vmem:[%s3 + $0x40] sm:$0xff]
  %v353 = vld [vmem:[%s3 + $0x48] sm:$0xff]
  %v354 = vld [vmem:[%s3 + $0x50] sm:$0xff]
  %v355 = vld [vmem:[%s3 + $0x58] sm:$0xff]
  %v356 = vld [vmem:[%s3 + $0x60] sm:$0xff]
  %v357 = vld [vmem:[%s3 + $0x68] sm:$0xff]
  %v358 = vld [vmem:[%s3 + $0x70] sm:$0xff]
  %v359 = vld [vmem:[%s3 + $0x78] sm:$0xff]
  %361 = vset.pattern.permute.xlu0 0
  %362 = vperm.xlu0 %361, %v344
  %v363 = vpop.permute.xlu0 %362
  %366 = vset.pattern.permute.xlu0 0
  %367 = vperm.xlu0 %366, %v345
  %v368 = vpop.permute.xlu0 %367
  %371 = vset.pattern.permute.xlu0 0
  %372 = vperm.xlu0 %371, %v346
  %v373 = vpop.permute.xlu0 %372
  %376 = vset.pattern.permute.xlu0 0
  %377 = vperm.xlu0 %376, %v347
  %v378 = vpop.permute.xlu0 %377
  %381 = vset.pattern.permute.xlu0 0
  %382 = vperm.xlu0 %381, %v348
  %v383 = vpop.permute.xlu0 %382
  %386 = vset.pattern.permute.xlu0 0
  %387 = vperm.xlu0 %386, %v349
  %v388 = vpop.permute.xlu0 %387
  %391 = vset.pattern.permute.xlu0 0
  %392 = vperm.xlu0 %391, %v350
  %v393 = vpop.permute.xlu0 %392
  %396 = vset.pattern.permute.xlu0 0
  %397 = vperm.xlu0 %396, %v351
  %v398 = vpop.permute.xlu0 %397
  %401 = vset.pattern.permute.xlu0 0
  %402 = vperm.xlu0 %401, %v352
  %v403 = vpop.permute.xlu0 %402
  %406 = vset.pattern.permute.xlu0 0
  %407 = vperm.xlu0 %406, %v353
  %v408 = vpop.permute.xlu0 %407
  %411 = vset.pattern.permute.xlu0 0
  %412 = vperm.xlu0 %411, %v354
  %v413 = vpop.permute.xlu0 %412
  %416 = vset.pattern.permute.xlu0 0
  %417 = vperm.xlu0 %416, %v355
  %v418 = vpop.permute.xlu0 %417
  %421 = vset.pattern.permute.xlu0 0
  %422 = vperm.xlu0 %421, %v356
  %v423 = vpop.permute.xlu0 %422
  %426 = vset.pattern.permute.xlu0 0
  %427 = vperm.xlu0 %426, %v357
  %v428 = vpop.permute.xlu0 %427
  %431 = vset.pattern.permute.xlu0 0
  %432 = vperm.xlu0 %431, %v358
  %v433 = vpop.permute.xlu0 %432
  %436 = vset.pattern.permute.xlu0 0
  %437 = vperm.xlu0 %436, %v359
  %v438 = vpop.permute.xlu0 %437
  %v456 = vunpack.c.l.b16 %v312
  %v457 = vunpack.c.h.b16 %v312
  %v458 = vunpack.c.l.b16 %v313
  %v459 = vunpack.c.h.b16 %v313
  %v460 = vunpack.c.l.b16 %v314
  %v461 = vunpack.c.h.b16 %v314
  %v462 = vunpack.c.l.b16 %v315
  %v463 = vunpack.c.h.b16 %v315
  %v464 = vunpack.c.l.b16 %v316
  %v465 = vunpack.c.h.b16 %v316
  %v466 = vunpack.c.l.b16 %v317
  %v467 = vunpack.c.h.b16 %v317
  %v468 = vunpack.c.l.b16 %v318
  %v469 = vunpack.c.h.b16 %v318
  %v470 = vunpack.c.l.b16 %v319
  %v471 = vunpack.c.h.b16 %v319
  %v472 = vunpack.c.l.b16 %v320
  %v473 = vunpack.c.h.b16 %v320
  %v474 = vunpack.c.l.b16 %v321
  %v475 = vunpack.c.h.b16 %v321
  %v476 = vunpack.c.l.b16 %v322
  %v477 = vunpack.c.h.b16 %v322
  %v478 = vunpack.c.l.b16 %v323
  %v479 = vunpack.c.h.b16 %v323
  %v480 = vunpack.c.l.b16 %v324
  %v481 = vunpack.c.h.b16 %v324
  %v482 = vunpack.c.l.b16 %v325
  %v483 = vunpack.c.h.b16 %v325
  %v484 = vunpack.c.l.b16 %v326
  %v485 = vunpack.c.h.b16 %v326
  %v486 = vunpack.c.l.b16 %v327
  %v487 = vunpack.c.h.b16 %v327
  %v488 = vpack.c.b16 %v458, %v456
  %v489 = vpack.c.b16 %v459, %v457
  %v490 = vpack.c.b16 %v462, %v460
  %v491 = vpack.c.b16 %v463, %v461
  %v492 = vpack.c.b16 %v466, %v464
  %v493 = vpack.c.b16 %v467, %v465
  %v494 = vpack.c.b16 %v470, %v468
  %v495 = vpack.c.b16 %v471, %v469
  %v496 = vpack.c.b16 %v474, %v472
  %v497 = vpack.c.b16 %v475, %v473
  %v498 = vpack.c.b16 %v478, %v476
  %v499 = vpack.c.b16 %v479, %v477
  %v500 = vpack.c.b16 %v482, %v480
  %v501 = vpack.c.b16 %v483, %v481
  %v502 = vpack.c.b16 %v486, %v484
  %v503 = vpack.c.b16 %v487, %v485
  %520 = vmatpush.bf16.msra.mxu0 %v335
  %521 = vmatpush.bf16.msra.mxu0 %v334
  %522 = vmatpush.bf16.msra.mxu0 %v333
  %523 = vmatpush.bf16.msra.mxu0 %v332
  %524 = vmatpush.bf16.msra.mxu0 %v331
  %525 = vmatpush.bf16.msra.mxu0 %v330
  %526 = vmatpush.bf16.msra.mxu0 %v329
  %527 = vmatpush.bf16.msra.mxu0 %v328
  %528 = vmatmul.bf16.gmra.mxu0 %v488
  %v529 = vpop.f32.mrf.mxu0
  %v530 = vadd.f32 %v363, %v529
  %v531 = vpop.f32.mrf.mxu0
  %v532 = vadd.f32 %v368, %v531
  %533 = vmatmul.bf16.gmra.mxu0 %v490
  %v534 = vpop.f32.mrf.mxu0
  %v535 = vadd.f32 %v373, %v534
  %v536 = vpop.f32.mrf.mxu0
  %v537 = vadd.f32 %v378, %v536
  %538 = vmatmul.bf16.gmra.mxu0 %v492
  %v539 = vpop.f32.mrf.mxu0
  %v540 = vadd.f32 %v383, %v539
  %v541 = vpop.f32.mrf.mxu0
  %v542 = vadd.f32 %v388, %v541
  %543 = vmatmul.bf16.gmra.mxu0 %v494
  %v544 = vpop.f32.mrf.mxu0
  %v545 = vadd.f32 %v393, %v544
  %v546 = vpop.f32.mrf.mxu0
  %v547 = vadd.f32 %v398, %v546
  %548 = vmatmul.bf16.gmra.mxu0 %v496
  %v549 = vpop.f32.mrf.mxu0
  %v550 = vadd.f32 %v403, %v549
  %v551 = vpop.f32.mrf.mxu0
  %v552 = vadd.f32 %v408, %v551
  %553 = vmatmul.bf16.gmra.mxu0 %v498
  %v554 = vpop.f32.mrf.mxu0
  %v555 = vadd.f32 %v413, %v554
  %v556 = vpop.f32.mrf.mxu0
  %v557 = vadd.f32 %v418, %v556
  %558 = vmatmul.bf16.gmra.mxu0 %v500
  %v559 = vpop.f32.mrf.mxu0
  %v560 = vadd.f32 %v423, %v559
  %v561 = vpop.f32.mrf.mxu0
  %v562 = vadd.f32 %v428, %v561
  %563 = vmatmul.bf16.gmra.mxu0 %v502
  %v564 = vpop.f32.mrf.mxu0
  %v565 = vadd.f32 %v433, %v564
  %v566 = vpop.f32.mrf.mxu0
  %v567 = vadd.f32 %v438, %v566
  %568 = vdwg.mxu0
  %569 = vmatpush.bf16.msra.mxu0 %v343
  %570 = vmatpush.bf16.msra.mxu0 %v342
  %571 = vmatpush.bf16.msra.mxu0 %v341
  %572 = vmatpush.bf16.msra.mxu0 %v340
  %573 = vmatpush.bf16.msra.mxu0 %v339
  %574 = vmatpush.bf16.msra.mxu0 %v338
  %575 = vmatpush.bf16.msra.mxu0 %v337
  %576 = vmatpush.bf16.msra.mxu0 %v336
  %577 = vmatmul.bf16.gmra.mxu0 %v489
  %v578 = vpop.f32.mrf.mxu0
  %v579 = vadd.f32 %v530, %v578
  %v580 = vpop.f32.mrf.mxu0
  %v581 = vadd.f32 %v532, %v580
  %582 = vmatmul.bf16.gmra.mxu0 %v491
  %v583 = vpop.f32.mrf.mxu0
  %v584 = vadd.f32 %v535, %v583
  %v585 = vpop.f32.mrf.mxu0
  %v586 = vadd.f32 %v537, %v585
  %587 = vmatmul.bf16.gmra.mxu0 %v493
  %v588 = vpop.f32.mrf.mxu0
  %v589 = vadd.f32 %v540, %v588
  %v590 = vpop.f32.mrf.mxu0
  %v591 = vadd.f32 %v542, %v590
  %592 = vmatmul.bf16.gmra.mxu0 %v495
  %v593 = vpop.f32.mrf.mxu0
  %v594 = vadd.f32 %v545, %v593
  %v595 = vpop.f32.mrf.mxu0
  %v596 = vadd.f32 %v547, %v595
  %597 = vmatmul.bf16.gmra.mxu0 %v497
  %v598 = vpop.f32.mrf.mxu0
  %v599 = vadd.f32 %v550, %v598
  %v600 = vpop.f32.mrf.mxu0
  %v601 = vadd.f32 %v552, %v600
  %602 = vmatmul.bf16.gmra.mxu0 %v499
  %v603 = vpop.f32.mrf.mxu0
  %v604 = vadd.f32 %v555, %v603
  %v605 = vpop.f32.mrf.mxu0
  %v606 = vadd.f32 %v557, %v605
  %607 = vmatmul.bf16.gmra.mxu0 %v501
  %v608 = vpop.f32.mrf.mxu0
  %v609 = vadd.f32 %v560, %v608
  %v610 = vpop.f32.mrf.mxu0
  %v611 = vadd.f32 %v562, %v610
  %612 = vmatmul.bf16.gmra.mxu0 %v503
  %v613 = vpop.f32.mrf.mxu0
  %v614 = vadd.f32 %v565, %v613
  %v615 = vpop.f32.mrf.mxu0
  %v616 = vadd.f32 %v567, %v615
  %617 = vdwg.mxu0
  %v618 = vmax.f32 %v579, 0.0
  %v619 = vmax.f32 %v581, 0.0
  %v620 = vmax.f32 %v584, 0.0
  %v621 = vmax.f32 %v586, 0.0
  %v622 = vmax.f32 %v589, 0.0
  %v623 = vmax.f32 %v591, 0.0
  %v624 = vmax.f32 %v594, 0.0
  %v625 = vmax.f32 %v596, 0.0
  %v626 = vmax.f32 %v599, 0.0
  %v627 = vmax.f32 %v601, 0.0
  %v628 = vmax.f32 %v604, 0.0
  %v629 = vmax.f32 %v606, 0.0
  %v630 = vmax.f32 %v609, 0.0
  %v631 = vmax.f32 %v611, 0.0
  %v632 = vmax.f32 %v614, 0.0
  %v633 = vmax.f32 %v616, 0.0
  %v634 = vld [vmem:[%s4] sm:$0xf]
  %v635 = vpack.c.bf16 %v619, %v618
  %v636 = vpack.c.bf16 %v621, %v620
  %v637 = vpack.c.bf16 %v623, %v622
  %v638 = vpack.c.bf16 %v625, %v624
  %v639 = vpack.c.bf16 %v627, %v626
  %v640 = vpack.c.bf16 %v629, %v628
  %v641 = vpack.c.bf16 %v631, %v630
  %v642 = vpack.c.bf16 %v633, %v632
  %v643 = vld [vmem:[%s5] sm:$0xff]
  %645 = vset.pattern.permute.xlu0 0
  %646 = vperm.xlu0 %645, %v643
  %v647 = vpop.permute.xlu0 %646
  %649 = vmatpush.bf16.msra.mxu0 %v642
  %650 = vmatpush.bf16.msra.mxu0 %v641
  %651 = vmatpush.bf16.msra.mxu0 %v640
  %652 = vmatpush.bf16.msra.mxu0 %v639
  %653 = vmatpush.bf16.msra.mxu0 %v638
  %654 = vmatpush.bf16.msra.mxu0 %v637
  %655 = vmatpush.bf16.msra.mxu0 %v636
  %656 = vmatpush.bf16.msra.mxu0 %v635
  %657 = vmatmul.bf16.gmra.mxu0 %v634
  %v658 = vpop.f32.mrf.mxu0
  %v659 = vadd.f32 %v647, %v658
  %v660 = vpop.f32.mrf.mxu0
  %661 = vdwg.mxu0
  %v662 = vsub.f32 0.0, %v659
  %v663 = vmul.f32 %v662, 1.442695
  %v664 = vpow.pop %v663
  %v665 = vadd.f32 %v664, 1.0
  %v666 = vrcp.pop %v665
  %v667 = vmul.f32 %v665, %v666
  %v668 = vsub.f32 1.0, %v667
  %v669 = vmul.f32 %v666, %v668
  %v670 = vadd.f32 %v666, %v669
  %vm671 = vweird.f32 %v665
  %vm672 = vweird.f32 %v666
  %vm673 = vmor %vm671, %vm672
  %v674 = vsel %vm673, %v666, %v670
  %v675 = vand.u32 2147483647, %v665
  %vm676 = vcmp.eq.f32.partialorder %v675, 8.507059e+37
  %v677 = vand.u32 %v665, 2147483648
  %v678 = vor.u32 1.1754944e-38, %v677
  %v679 = vsel %vm676, %v678, %v674
  %v680 = vmul.f32 1.0, %v679
  %v682 = vrot.slane %v680, 1
  %v684 = vadd.f32 %v680, %v682
  %v685 = vrcp.pop %v684
  %v686 = vmul.f32 %v684, %v685
  %v687 = vsub.f32 1.0, %v686
  %v688 = vmul.f32 %v685, %v687
  %v689 = vadd.f32 %v685, %v688
  %vm690 = vweird.f32 %v684
  %vm691 = vweird.f32 %v685
  %vm692 = vmor %vm690, %vm691
  %v693 = vsel %vm692, %v685, %v689
  %v694 = vand.u32 2147483647, %v684
  %vm695 = vcmp.eq.f32.partialorder %v694, 8.507059e+37
  %v696 = vand.u32 %v684, 2147483648
  %v697 = vor.u32 1.1754944e-38, %v696
  %v698 = vsel %vm695, %v697, %v693
  %v699 = vmul.f32 %v680, %v698
  %v700 = vmul.f32 %v699, %v24
  %v702 = vrot.slane %v698, 7
  %v704 = vmul.f32 %v680, %v702
  %v706 = vrot.slane %v24, 7
  %v708 = vmul.f32 %v704, %v706
  %v709 = vmin.f32 %v680, %v682
  %v710 = vmax.f32 %v680, %v682
  %v712 = vrot.slane %v709, 2
  %v714 = vadd.f32 %v709, %v712
  %v716 = vrot.slane %v710, 2
  %v718 = vadd.f32 %v710, %v716
  %v720 = vrot.slane %v714, 2
  %vm722 = vcmp.lt.f32.partialorder %v24, %v720
  %v723 = vsel %vm722, 1, 0
  %v724 = vcvt.s32.f32 %v723
  %v726 = vrot.slane %v718, 2
  %vm728 = vcmp.gt.f32.partialorder %v24, %v726
  %v729 = vsel %vm728, 1, 0
  %v730 = vcvt.s32.f32 %v729
  %vm731 = vcmp.gt.f32.partialorder %v24, %v720
  %vm732 = vcmp.lt.f32.partialorder %v24, %v726
  %vm733 = vmand %vm731, %vm732
  %v734 = vsel %vm733, 1, 0
  %v735 = vcvt.s32.f32 %v734
  %v736 = vmul.f32 %v724, %v712
  %v737 = vmul.f32 %v730, %v716
  %v738 = vadd.f32 %v736, %v737
  %v739 = vmul.f32 %v735, %v700
  %v740 = vadd.f32 %v738, %v739
  %741 = vst [vmem:[%s6] sm:$0x1] %v740
  %v742 = vrot.slane %v709, 4
  %v744 = vmul.f32 %v724, %v742
  %v745 = vrot.slane %v710, 4
  %v747 = vmul.f32 %v730, %v745
  %v748 = vadd.f32 %v744, %v747
  %v750 = vrot.slane %v708, 1
  %v752 = vmul.f32 %v735, %v750
  %v753 = vadd.f32 %v748, %v752
  %754 = vst [vmem:[%s6 + $0x1] sm:$0x1] %v753
  // Predicated region
  $region26: #{actor_forward.1} parent=0 // pred_check
    _
  $region27: #{actor_forward.1} parent=0 // pred_check_branch
    %756 = sbr.rel (0) target = $region29
  $region28: #{actor_forward.1} parent=0 // pred_region
    _
  $region29: #{actor_forward.1} parent=0 // pred_fallthru
    _
  // Predicated region
  $region30: #{actor_forward.1} parent=0 // pred_check
    _
  $region31: #{actor_forward.1} parent=0 // pred_check_branch
    %758 = sbr.rel (0) target = $region33
  $region32: #{actor_forward.1} parent=0 // pred_region
    _
  $region33: #{actor_forward.1} parent=0 // pred_fallthru
    _

</llo_original>
